<compile_context>
chip_gen: v5e
topology: v5e:2x2
jax: 0.10.0
libtpu: 0.0.40
codegen_flags: <defaults>
</compile_context>

<pallas_src>
import jax
import jax.numpy as jnp
from jax import lax
from jax.experimental import pallas as pl
from jax.experimental.pallas import tpu as pltpu

# ---------------- model hyper-parameters (BaseModel defaults) ----------------
VOCAB = 100            # embedding_input_dim (set manually per BaseModel docs)
VOCAB_PAD = 128        # vocab padded to lane width
EMB_DIM = 32           # embedding_output_dim
SEQ = 8                # query/doc sequence length
BATCH = 2
MLP_UNITS = 128        # mlp_num_units
MLP_FAN_OUT = 64       # mlp_num_fan_out
OUT_LANES = 128        # lane-dense output slab width (wrapper slices [:, :1])
MAX_TILE_B = 256       # batch tile: fills v6e/v7x MXU rows; v5e runs 2 M-passes


def _round_up(x, m):
    return ((x + m - 1) // m) * m


def _choose_tile_b(batch):
    b8 = _round_up(batch, 8)
    tile = min(MAX_TILE_B, b8)
    # v7x: make sure the grid has >=2 steps once there is enough work so the
    # "parallel" batch axis can be sharded across both TensorCores.
    if b8 >= 16:
        tile = min(tile, _round_up((batch + 1) // 2, 8))
    return max(tile, 8)


# ---------------------------- Pallas kernel ----------------------------------
def _fused_kernel(qid_ref, did_ref,
                  e1_ref, b1_ref,
                  w2_ref, b2_ref,
                  w3_ref, b3_ref,
                  w4_ref, b4_ref,
                  wo_ref, bo_ref,
                  out_ref):
    """Bag-of-words counts -> single K=256 matmul (emb folded into W1) -> MLP -> out."""
    tile_b = qid_ref.shape[0]
    vocab_iota = lax.broadcasted_iota(jnp.int32, (tile_b, VOCAB_PAD), 1)

    def counts_of(ids_ref):
        # counts[b, v] = #{s : ids[b, s] == v}; integers <= SEQ, exact in bf16.
        ids = ids_ref[...]                                   # (tile_b, SEQ) int32
        c = jnp.zeros((tile_b, VOCAB_PAD), jnp.float32)
        for s in range(SEQ):                                 # static unroll, SEQ tiny
            c = c + (ids[:, s:s + 1] == vocab_iota).astype(jnp.float32)
        return c

    # Concatenate query/doc counts along lanes -> one (tile_b, 256) bf16 operand.
    counts = jnp.concatenate([counts_of(qid_ref), counts_of(did_ref)],
                             axis=-1).astype(jnp.bfloat16)

    # Layer 1: embedding + mean-pool + concat + Linear all folded into one
    # K=256 MXU matmul (E1 already contains emb @ W1 and the 1/SEQ scale).
    h = jnp.dot(counts, e1_ref[...], preferred_element_type=jnp.float32) + b1_ref[...]
    h = jnp.maximum(h, 0.0)

    h = jnp.maximum(jnp.dot(h.astype(jnp.bfloat16), w2_ref[...],
                            preferred_element_type=jnp.float32) + b2_ref[...], 0.0)
    h = jnp.maximum(jnp.dot(h.astype(jnp.bfloat16), w3_ref[...],
                            preferred_element_type=jnp.float32) + b3_ref[...], 0.0)
    h = jnp.maximum(jnp.dot(h.astype(jnp.bfloat16), w4_ref[...],
                            preferred_element_type=jnp.float32) + b4_ref[...], 0.0)

    # Output Linear (64 -> 1) on the MXU via a zero-padded (64, 128) weight.
    # Column 0 is the model output; the lane-dense slab avoids masked stores.
    out_ref[...] = (jnp.dot(h.astype(jnp.bfloat16), wo_ref[...],
                            preferred_element_type=jnp.float32) + bo_ref[...])


# ------------------------------ forward (wrapper) -----------------------------
def forward(query_ids, doc_ids, params):
    (e1, b1, w2, b2, w3, b3, w4, b4, wo_pad, bo_row) = params
    batch = query_ids.shape[0]

    tile_b = _choose_tile_b(batch)
    b_pad = _round_up(batch, tile_b)
    pad = b_pad - batch
    if pad:
        query_ids = jnp.pad(query_ids, ((0, pad), (0, 0)))
        doc_ids = jnp.pad(doc_ids, ((0, pad), (0, 0)))

    const2 = lambda i: (0, 0)     # weights: same block every grid step (VMEM-resident)
    batched = lambda i: (i, 0)

    out = pl.pallas_call(
        _fused_kernel,
        out_shape=jax.ShapeDtypeStruct((b_pad, OUT_LANES), jnp.float32),
        grid=(b_pad // tile_b,),
        in_specs=[
            pl.BlockSpec((tile_b, SEQ), batched),   # query ids
            pl.BlockSpec((tile_b, SEQ), batched),   # doc ids
            pl.BlockSpec(e1.shape, const2),
            pl.BlockSpec(b1.shape, const2),
            pl.BlockSpec(w2.shape, const2),
            pl.BlockSpec(b2.shape, const2),
            pl.BlockSpec(w3.shape, const2),
            pl.BlockSpec(b3.shape, const2),
            pl.BlockSpec(w4.shape, const2),
            pl.BlockSpec(b4.shape, const2),
            pl.BlockSpec(wo_pad.shape, const2),
            pl.BlockSpec(bo_row.shape, const2),
        ],
        out_specs=pl.BlockSpec((tile_b, OUT_LANES), batched),
        compiler_params=pltpu.CompilerParams(
            dimension_semantics=("parallel",)),     # batch axis -> both TCs on v7x
    )(query_ids, doc_ids, e1, b1, w2, b2, w3, b3, w4, b4, wo_pad, bo_row)

    return out[:batch, :1]


# ----------------------------- parameter init --------------------------------
def init_params(key):
    ks = jax.random.split(key, 12)
    scale = 0.05

    emb = jnp.zeros((VOCAB_PAD, EMB_DIM), jnp.float32).at[:VOCAB].set(
        jax.random.normal(ks[0], (VOCAB, EMB_DIM), jnp.float32) * scale)

    w1 = jax.random.normal(ks[1], (2 * EMB_DIM, MLP_UNITS), jnp.float32) * scale
    b1 = jax.random.normal(ks[2], (1, MLP_UNITS), jnp.float32) * scale
    # Fold embedding + mean-pool scale into layer 1 (done in f32, stored bf16):
    #   mean_q @ W1q + mean_d @ W1d == [counts_q, counts_d] @ ([emb@W1q ; emb@W1d] / SEQ)
    e1 = jnp.concatenate([emb @ w1[:EMB_DIM], emb @ w1[EMB_DIM:]], axis=0) * (1.0 / SEQ)
    e1 = e1.astype(jnp.bfloat16)                        # (2*VOCAB_PAD, MLP_UNITS)

    w2 = (jax.random.normal(ks[3], (MLP_UNITS, MLP_UNITS), jnp.float32) * scale).astype(jnp.bfloat16)
    b2 = jax.random.normal(ks[4], (1, MLP_UNITS), jnp.float32) * scale
    w3 = (jax.random.normal(ks[5], (MLP_UNITS, MLP_UNITS), jnp.float32) * scale).astype(jnp.bfloat16)
    b3 = jax.random.normal(ks[6], (1, MLP_UNITS), jnp.float32) * scale
    w4 = (jax.random.normal(ks[7], (MLP_UNITS, MLP_FAN_OUT), jnp.float32) * scale).astype(jnp.bfloat16)
    b4 = jax.random.normal(ks[8], (1, MLP_FAN_OUT), jnp.float32) * scale

    wo = jax.random.normal(ks[9], (MLP_FAN_OUT, 1), jnp.float32) * scale
    wo_pad = jnp.zeros((MLP_FAN_OUT, OUT_LANES), jnp.float32).at[:, :1].set(wo)
    wo_pad = wo_pad.astype(jnp.bfloat16)                # (64, 128), column 0 = Wo
    bo = jax.random.normal(ks[10], (1, 1), jnp.float32) * scale
    bo_row = jnp.broadcast_to(bo, (1, OUT_LANES))       # lane-dense bias row

    return (e1, b1, w2, b2, w3, b3, w4, b4, wo_pad, bo_row)


# ------------------------- pure-JAX reference (same math) ---------------------
def forward_ref(query_ids, doc_ids, params):
    (e1, b1, w2, b2, w3, b3, w4, b4, wo_pad, bo_row) = params

    def counts_of(ids):
        onehot = jax.nn.one_hot(ids, VOCAB_PAD, dtype=jnp.float32)   # (B, S, VP)
        return onehot.sum(axis=1)

    counts = jnp.concatenate([counts_of(query_ids), counts_of(doc_ids)],
                             axis=-1).astype(jnp.bfloat16)
    h = jnp.maximum(jnp.dot(counts, e1, preferred_element_type=jnp.float32) + b1, 0.0)
    h = jnp.maximum(jnp.dot(h.astype(jnp.bfloat16), w2, preferred_element_type=jnp.float32) + b2, 0.0)
    h = jnp.maximum(jnp.dot(h.astype(jnp.bfloat16), w3, preferred_element_type=jnp.float32) + b3, 0.0)
    h = jnp.maximum(jnp.dot(h.astype(jnp.bfloat16), w4, preferred_element_type=jnp.float32) + b4, 0.0)
    y = jnp.dot(h.astype(jnp.bfloat16), wo_pad, preferred_element_type=jnp.float32) + bo_row
    return y[:, :1]


if __name__ == "__main__":
    key = jax.random.PRNGKey(0)
    k_params, k_q, k_d = jax.random.split(key, 3)

    params = init_params(k_params)
    query_ids = jax.random.randint(k_q, (BATCH, SEQ), 0, VOCAB, dtype=jnp.int32)
    doc_ids = jax.random.randint(k_d, (BATCH, SEQ), 0, VOCAB, dtype=jnp.int32)

    fwd = jax.jit(forward)
    out = jax.block_until_ready(fwd(query_ids, doc_ids, params))
    ref = jax.block_until_ready(forward_ref(query_ids, doc_ids, params))

    assert out.shape == (BATCH, 1)
    assert jnp.allclose(out, ref, atol=1e-3, rtol=1e-2), (out, ref)

    # TODO(synk): BaseModel.forward is abstract (`pass`); the concrete pipeline
    # above realizes the base class's default embedding/MLP/output builders.
    print("KERNEL_OK")
</pallas_src>

<mosaic_0001>
module attributes {stable_mosaic.version = 11 : i64} {
  func.func @_fused_kernel(%arg0: i32, %arg1: memref<8x8xi32, #tpu.memory_space<vmem>>, %arg2: memref<8x8xi32, #tpu.memory_space<vmem>>, %arg3: memref<256x128xbf16, #tpu.memory_space<vmem>>, %arg4: memref<1x128xf32, #tpu.memory_space<vmem>>, %arg5: memref<128x128xbf16, #tpu.memory_space<vmem>>, %arg6: memref<1x128xf32, #tpu.memory_space<vmem>>, %arg7: memref<128x128xbf16, #tpu.memory_space<vmem>>, %arg8: memref<1x128xf32, #tpu.memory_space<vmem>>, %arg9: memref<128x64xbf16, #tpu.memory_space<vmem>>, %arg10: memref<1x64xf32, #tpu.memory_space<vmem>>, %arg11: memref<64x128xbf16, #tpu.memory_space<vmem>>, %arg12: memref<1x128xf32, #tpu.memory_space<vmem>>, %arg13: memref<8x128xf32, #tpu.memory_space<vmem>>) attributes {dimension_semantics = [#tpu.dimension_semantics<parallel>], iteration_bounds = array<i64: 1>, scalar_prefetch = 0 : i64, scratch_operands = 0 : i64, tpu.core_type = #tpu.core_type<tc>, window_params = [{transform_indices = @transform_0, window_bounds = array<i64: 8, 8>}, {transform_indices = @transform_1, window_bounds = array<i64: 8, 8>}, {pipeline_mode = #tpu.pipeline_mode<synchronous>, transform_indices = @transform_2, window_bounds = array<i64: 256, 128>}, {pipeline_mode = #tpu.pipeline_mode<synchronous>, transform_indices = @transform_3, window_bounds = array<i64: 1, 128>}, {pipeline_mode = #tpu.pipeline_mode<synchronous>, transform_indices = @transform_4, window_bounds = array<i64: 128, 128>}, {pipeline_mode = #tpu.pipeline_mode<synchronous>, transform_indices = @transform_5, window_bounds = array<i64: 1, 128>}, {pipeline_mode = #tpu.pipeline_mode<synchronous>, transform_indices = @transform_6, window_bounds = array<i64: 128, 128>}, {pipeline_mode = #tpu.pipeline_mode<synchronous>, transform_indices = @transform_7, window_bounds = array<i64: 1, 128>}, {pipeline_mode = #tpu.pipeline_mode<synchronous>, transform_indices = @transform_8, window_bounds = array<i64: 128, 64>}, {pipeline_mode = #tpu.pipeline_mode<synchronous>, transform_indices = @transform_9, window_bounds = array<i64: 1, 64>}, {pipeline_mode = #tpu.pipeline_mode<synchronous>, transform_indices = @transform_10, window_bounds = array<i64: 64, 128>}, {pipeline_mode = #tpu.pipeline_mode<synchronous>, transform_indices = @transform_11, window_bounds = array<i64: 1, 128>}, {transform_indices = @transform_12, window_bounds = array<i64: 8, 128>}]} {
    %0 = tpu.iota {dimensions = array<i32: 1>} : vector<8x128xi32>
    %c0 = arith.constant 0 : index
    %c0_0 = arith.constant 0 : index
    %1 = vector.load %arg1[%c0, %c0_0] : memref<8x8xi32, #tpu.memory_space<vmem>>, vector<8x8xi32>
    %cst = arith.constant 0.000000e+00 : f32
    %2 = vector.broadcast %cst : f32 to vector<8x128xf32>
    %3 = vector.extract_strided_slice %1 {offsets = [0, 0], sizes = [8, 1], strides = [1, 1]} : vector<8x8xi32> to vector<8x1xi32>
    %4 = vector.broadcast %3 : vector<8x1xi32> to vector<8x128xi32>
    %5 = arith.cmpi eq, %4, %0 : vector<8x128xi32>
    %6 = arith.extui %5 : vector<8x128xi1> to vector<8x128xi32>
    %7 = arith.sitofp %6 : vector<8x128xi32> to vector<8x128xf32>
    %8 = arith.addf %2, %7 : vector<8x128xf32>
    %9 = vector.extract_strided_slice %1 {offsets = [0, 1], sizes = [8, 1], strides = [1, 1]} : vector<8x8xi32> to vector<8x1xi32>
    %10 = vector.broadcast %9 : vector<8x1xi32> to vector<8x128xi32>
    %11 = arith.cmpi eq, %10, %0 : vector<8x128xi32>
    %12 = arith.extui %11 : vector<8x128xi1> to vector<8x128xi32>
    %13 = arith.sitofp %12 : vector<8x128xi32> to vector<8x128xf32>
    %14 = arith.addf %8, %13 : vector<8x128xf32>
    %15 = vector.extract_strided_slice %1 {offsets = [0, 2], sizes = [8, 1], strides = [1, 1]} : vector<8x8xi32> to vector<8x1xi32>
    %16 = vector.broadcast %15 : vector<8x1xi32> to vector<8x128xi32>
    %17 = arith.cmpi eq, %16, %0 : vector<8x128xi32>
    %18 = arith.extui %17 : vector<8x128xi1> to vector<8x128xi32>
    %19 = arith.sitofp %18 : vector<8x128xi32> to vector<8x128xf32>
    %20 = arith.addf %14, %19 : vector<8x128xf32>
    %21 = vector.extract_strided_slice %1 {offsets = [0, 3], sizes = [8, 1], strides = [1, 1]} : vector<8x8xi32> to vector<8x1xi32>
    %22 = vector.broadcast %21 : vector<8x1xi32> to vector<8x128xi32>
    %23 = arith.cmpi eq, %22, %0 : vector<8x128xi32>
    %24 = arith.extui %23 : vector<8x128xi1> to vector<8x128xi32>
    %25 = arith.sitofp %24 : vector<8x128xi32> to vector<8x128xf32>
    %26 = arith.addf %20, %25 : vector<8x128xf32>
    %27 = vector.extract_strided_slice %1 {offsets = [0, 4], sizes = [8, 1], strides = [1, 1]} : vector<8x8xi32> to vector<8x1xi32>
    %28 = vector.broadcast %27 : vector<8x1xi32> to vector<8x128xi32>
    %29 = arith.cmpi eq, %28, %0 : vector<8x128xi32>
    %30 = arith.extui %29 : vector<8x128xi1> to vector<8x128xi32>
    %31 = arith.sitofp %30 : vector<8x128xi32> to vector<8x128xf32>
    %32 = arith.addf %26, %31 : vector<8x128xf32>
    %33 = vector.extract_strided_slice %1 {offsets = [0, 5], sizes = [8, 1], strides = [1, 1]} : vector<8x8xi32> to vector<8x1xi32>
    %34 = vector.broadcast %33 : vector<8x1xi32> to vector<8x128xi32>
    %35 = arith.cmpi eq, %34, %0 : vector<8x128xi32>
    %36 = arith.extui %35 : vector<8x128xi1> to vector<8x128xi32>
    %37 = arith.sitofp %36 : vector<8x128xi32> to vector<8x128xf32>
    %38 = arith.addf %32, %37 : vector<8x128xf32>
    %39 = vector.extract_strided_slice %1 {offsets = [0, 6], sizes = [8, 1], strides = [1, 1]} : vector<8x8xi32> to vector<8x1xi32>
    %40 = vector.broadcast %39 : vector<8x1xi32> to vector<8x128xi32>
    %41 = arith.cmpi eq, %40, %0 : vector<8x128xi32>
    %42 = arith.extui %41 : vector<8x128xi1> to vector<8x128xi32>
    %43 = arith.sitofp %42 : vector<8x128xi32> to vector<8x128xf32>
    %44 = arith.addf %38, %43 : vector<8x128xf32>
    %45 = vector.extract_strided_slice %1 {offsets = [0, 7], sizes = [8, 1], strides = [1, 1]} : vector<8x8xi32> to vector<8x1xi32>
    %46 = vector.broadcast %45 : vector<8x1xi32> to vector<8x128xi32>
    %47 = arith.cmpi eq, %46, %0 : vector<8x128xi32>
    %48 = arith.extui %47 : vector<8x128xi1> to vector<8x128xi32>
    %49 = arith.sitofp %48 : vector<8x128xi32> to vector<8x128xf32>
    %50 = arith.addf %44, %49 : vector<8x128xf32>
    %c0_1 = arith.constant 0 : index
    %c0_2 = arith.constant 0 : index
    %51 = vector.load %arg2[%c0_1, %c0_2] : memref<8x8xi32, #tpu.memory_space<vmem>>, vector<8x8xi32>
    %cst_3 = arith.constant 0.000000e+00 : f32
    %52 = vector.broadcast %cst_3 : f32 to vector<8x128xf32>
    %53 = vector.extract_strided_slice %51 {offsets = [0, 0], sizes = [8, 1], strides = [1, 1]} : vector<8x8xi32> to vector<8x1xi32>
    %54 = vector.broadcast %53 : vector<8x1xi32> to vector<8x128xi32>
    %55 = arith.cmpi eq, %54, %0 : vector<8x128xi32>
    %56 = arith.extui %55 : vector<8x128xi1> to vector<8x128xi32>
    %57 = arith.sitofp %56 : vector<8x128xi32> to vector<8x128xf32>
    %58 = arith.addf %52, %57 : vector<8x128xf32>
    %59 = vector.extract_strided_slice %51 {offsets = [0, 1], sizes = [8, 1], strides = [1, 1]} : vector<8x8xi32> to vector<8x1xi32>
    %60 = vector.broadcast %59 : vector<8x1xi32> to vector<8x128xi32>
    %61 = arith.cmpi eq, %60, %0 : vector<8x128xi32>
    %62 = arith.extui %61 : vector<8x128xi1> to vector<8x128xi32>
    %63 = arith.sitofp %62 : vector<8x128xi32> to vector<8x128xf32>
    %64 = arith.addf %58, %63 : vector<8x128xf32>
    %65 = vector.extract_strided_slice %51 {offsets = [0, 2], sizes = [8, 1], strides = [1, 1]} : vector<8x8xi32> to vector<8x1xi32>
    %66 = vector.broadcast %65 : vector<8x1xi32> to vector<8x128xi32>
    %67 = arith.cmpi eq, %66, %0 : vector<8x128xi32>
    %68 = arith.extui %67 : vector<8x128xi1> to vector<8x128xi32>
    %69 = arith.sitofp %68 : vector<8x128xi32> to vector<8x128xf32>
    %70 = arith.addf %64, %69 : vector<8x128xf32>
    %71 = vector.extract_strided_slice %51 {offsets = [0, 3], sizes = [8, 1], strides = [1, 1]} : vector<8x8xi32> to vector<8x1xi32>
    %72 = vector.broadcast %71 : vector<8x1xi32> to vector<8x128xi32>
    %73 = arith.cmpi eq, %72, %0 : vector<8x128xi32>
    %74 = arith.extui %73 : vector<8x128xi1> to vector<8x128xi32>
    %75 = arith.sitofp %74 : vector<8x128xi32> to vector<8x128xf32>
    %76 = arith.addf %70, %75 : vector<8x128xf32>
    %77 = vector.extract_strided_slice %51 {offsets = [0, 4], sizes = [8, 1], strides = [1, 1]} : vector<8x8xi32> to vector<8x1xi32>
    %78 = vector.broadcast %77 : vector<8x1xi32> to vector<8x128xi32>
    %79 = arith.cmpi eq, %78, %0 : vector<8x128xi32>
    %80 = arith.extui %79 : vector<8x128xi1> to vector<8x128xi32>
    %81 = arith.sitofp %80 : vector<8x128xi32> to vector<8x128xf32>
    %82 = arith.addf %76, %81 : vector<8x128xf32>
    %83 = vector.extract_strided_slice %51 {offsets = [0, 5], sizes = [8, 1], strides = [1, 1]} : vector<8x8xi32> to vector<8x1xi32>
    %84 = vector.broadcast %83 : vector<8x1xi32> to vector<8x128xi32>
    %85 = arith.cmpi eq, %84, %0 : vector<8x128xi32>
    %86 = arith.extui %85 : vector<8x128xi1> to vector<8x128xi32>
    %87 = arith.sitofp %86 : vector<8x128xi32> to vector<8x128xf32>
    %88 = arith.addf %82, %87 : vector<8x128xf32>
    %89 = vector.extract_strided_slice %51 {offsets = [0, 6], sizes = [8, 1], strides = [1, 1]} : vector<8x8xi32> to vector<8x1xi32>
    %90 = vector.broadcast %89 : vector<8x1xi32> to vector<8x128xi32>
    %91 = arith.cmpi eq, %90, %0 : vector<8x128xi32>
    %92 = arith.extui %91 : vector<8x128xi1> to vector<8x128xi32>
    %93 = arith.sitofp %92 : vector<8x128xi32> to vector<8x128xf32>
    %94 = arith.addf %88, %93 : vector<8x128xf32>
    %95 = vector.extract_strided_slice %51 {offsets = [0, 7], sizes = [8, 1], strides = [1, 1]} : vector<8x8xi32> to vector<8x1xi32>
    %96 = vector.broadcast %95 : vector<8x1xi32> to vector<8x128xi32>
    %97 = arith.cmpi eq, %96, %0 : vector<8x128xi32>
    %98 = arith.extui %97 : vector<8x128xi1> to vector<8x128xi32>
    %99 = arith.sitofp %98 : vector<8x128xi32> to vector<8x128xf32>
    %100 = arith.addf %94, %99 : vector<8x128xf32>
    %101 = tpu.concatenate %50, %100 in 1 : vector<8x128xf32>, vector<8x128xf32> -> vector<8x256xf32>
    %102 = arith.truncf %101 : vector<8x256xf32> to vector<8x256xbf16>
    %c0_4 = arith.constant 0 : index
    %c0_5 = arith.constant 0 : index
    %103 = vector.load %arg3[%c0_4, %c0_5] : memref<256x128xbf16, #tpu.memory_space<vmem>>, vector<256x128xbf16>
    %cst_6 = arith.constant dense<0.000000e+00> : vector<8x128xf32>
    %104 = tpu.matmul %102, %103, %cst_6 {dimension_numbers = #tpu.dot_dimension_numbers<[1], [0], [0], [1], [0, 0, 1, 1], [], []>} : vector<8x256xbf16>, vector<256x128xbf16>, vector<8x128xf32> -> vector<8x128xf32>
    %c0_7 = arith.constant 0 : index
    %c0_8 = arith.constant 0 : index
    %105 = vector.load %arg4[%c0_7, %c0_8] : memref<1x128xf32, #tpu.memory_space<vmem>>, vector<1x128xf32>
    %106 = vector.broadcast %105 : vector<1x128xf32> to vector<8x128xf32>
    %107 = arith.addf %104, %106 : vector<8x128xf32>
    %cst_9 = arith.constant 0.000000e+00 : f32
    %108 = vector.broadcast %cst_9 : f32 to vector<8x128xf32>
    %109 = arith.maximumf %107, %108 : vector<8x128xf32>
    %110 = arith.truncf %109 : vector<8x128xf32> to vector<8x128xbf16>
    %c0_10 = arith.constant 0 : index
    %c0_11 = arith.constant 0 : index
    %111 = vector.load %arg5[%c0_10, %c0_11] : memref<128x128xbf16, #tpu.memory_space<vmem>>, vector<128x128xbf16>
    %cst_12 = arith.constant dense<0.000000e+00> : vector<8x128xf32>
    %112 = tpu.matmul %110, %111, %cst_12 {dimension_numbers = #tpu.dot_dimension_numbers<[1], [0], [0], [1], [0, 0, 1, 1], [], []>} : vector<8x128xbf16>, vector<128x128xbf16>, vector<8x128xf32> -> vector<8x128xf32>
    %c0_13 = arith.constant 0 : index
    %c0_14 = arith.constant 0 : index
    %113 = vector.load %arg6[%c0_13, %c0_14] : memref<1x128xf32, #tpu.memory_space<vmem>>, vector<1x128xf32>
    %114 = vector.broadcast %113 : vector<1x128xf32> to vector<8x128xf32>
    %115 = arith.addf %112, %114 : vector<8x128xf32>
    %cst_15 = arith.constant 0.000000e+00 : f32
    %116 = vector.broadcast %cst_15 : f32 to vector<8x128xf32>
    %117 = arith.maximumf %115, %116 : vector<8x128xf32>
    %118 = arith.truncf %117 : vector<8x128xf32> to vector<8x128xbf16>
    %c0_16 = arith.constant 0 : index
    %c0_17 = arith.constant 0 : index
    %119 = vector.load %arg7[%c0_16, %c0_17] : memref<128x128xbf16, #tpu.memory_space<vmem>>, vector<128x128xbf16>
    %cst_18 = arith.constant dense<0.000000e+00> : vector<8x128xf32>
    %120 = tpu.matmul %118, %119, %cst_18 {dimension_numbers = #tpu.dot_dimension_numbers<[1], [0], [0], [1], [0, 0, 1, 1], [], []>} : vector<8x128xbf16>, vector<128x128xbf16>, vector<8x128xf32> -> vector<8x128xf32>
    %c0_19 = arith.constant 0 : index
    %c0_20 = arith.constant 0 : index
    %121 = vector.load %arg8[%c0_19, %c0_20] : memref<1x128xf32, #tpu.memory_space<vmem>>, vector<1x128xf32>
    %122 = vector.broadcast %121 : vector<1x128xf32> to vector<8x128xf32>
    %123 = arith.addf %120, %122 : vector<8x128xf32>
    %cst_21 = arith.constant 0.000000e+00 : f32
    %124 = vector.broadcast %cst_21 : f32 to vector<8x128xf32>
    %125 = arith.maximumf %123, %124 : vector<8x128xf32>
    %126 = arith.truncf %125 : vector<8x128xf32> to vector<8x128xbf16>
    %c0_22 = arith.constant 0 : index
    %c0_23 = arith.constant 0 : index
    %127 = vector.load %arg9[%c0_22, %c0_23] : memref<128x64xbf16, #tpu.memory_space<vmem>>, vector<128x64xbf16>
    %cst_24 = arith.constant dense<0.000000e+00> : vector<8x64xf32>
    %128 = tpu.matmul %126, %127, %cst_24 {dimension_numbers = #tpu.dot_dimension_numbers<[1], [0], [0], [1], [0, 0, 1, 1], [], []>} : vector<8x128xbf16>, vector<128x64xbf16>, vector<8x64xf32> -> vector<8x64xf32>
    %c0_25 = arith.constant 0 : index
    %c0_26 = arith.constant 0 : index
    %129 = vector.load %arg10[%c0_25, %c0_26] : memref<1x64xf32, #tpu.memory_space<vmem>>, vector<1x64xf32>
    %130 = vector.broadcast %129 : vector<1x64xf32> to vector<8x64xf32>
    %131 = arith.addf %128, %130 : vector<8x64xf32>
    %cst_27 = arith.constant 0.000000e+00 : f32
    %132 = vector.broadcast %cst_27 : f32 to vector<8x64xf32>
    %133 = arith.maximumf %131, %132 : vector<8x64xf32>
    %134 = arith.truncf %133 : vector<8x64xf32> to vector<8x64xbf16>
    %c0_28 = arith.constant 0 : index
    %c0_29 = arith.constant 0 : index
    %135 = vector.load %arg11[%c0_28, %c0_29] : memref<64x128xbf16, #tpu.memory_space<vmem>>, vector<64x128xbf16>
    %cst_30 = arith.constant dense<0.000000e+00> : vector<8x128xf32>
    %136 = tpu.matmul %134, %135, %cst_30 {dimension_numbers = #tpu.dot_dimension_numbers<[1], [0], [0], [1], [0, 0, 1, 1], [], []>} : vector<8x64xbf16>, vector<64x128xbf16>, vector<8x128xf32> -> vector<8x128xf32>
    %c0_31 = arith.constant 0 : index
    %c0_32 = arith.constant 0 : index
    %137 = vector.load %arg12[%c0_31, %c0_32] : memref<1x128xf32, #tpu.memory_space<vmem>>, vector<1x128xf32>
    %138 = vector.broadcast %137 : vector<1x128xf32> to vector<8x128xf32>
    %139 = arith.addf %136, %138 : vector<8x128xf32>
    %c0_33 = arith.constant 0 : index
    %c0_34 = arith.constant 0 : index
    %140 = vector.load %arg13[%c0_33, %c0_34] : memref<8x128xf32, #tpu.memory_space<vmem>>, vector<8x128xf32>
    tpu.vector_store %arg13[%c0_33, %c0_34], %139 {strides = array<i32>} : memref<8x128xf32, #tpu.memory_space<vmem>>, vector<8x128xf32>,
    return
  }
  func.func @transform_0(%arg0: i32) -> (i32, i32) {
    %c0_i32 = arith.constant 0 : i32
    %c0_i32_0 = arith.constant 0 : i32
    return %arg0, %c0_i32 : i32, i32
  }
  func.func @transform_1(%arg0: i32) -> (i32, i32) {
    %c0_i32 = arith.constant 0 : i32
    %c0_i32_0 = arith.constant 0 : i32
    return %arg0, %c0_i32 : i32, i32
  }
  func.func @transform_2(%arg0: i32) -> (i32, i32) {
    %c0_i32 = arith.constant 0 : i32
    %c0_i32_0 = arith.constant 0 : i32
    %c0_i32_1 = arith.constant 0 : i32
    return %c0_i32, %c0_i32_0 : i32, i32
  }
  func.func @transform_3(%arg0: i32) -> (i32, i32) {
    %c0_i32 = arith.constant 0 : i32
    %c0_i32_0 = arith.constant 0 : i32
    %c0_i32_1 = arith.constant 0 : i32
    return %c0_i32, %c0_i32_0 : i32, i32
  }
  func.func @transform_4(%arg0: i32) -> (i32, i32) {
    %c0_i32 = arith.constant 0 : i32
    %c0_i32_0 = arith.constant 0 : i32
    %c0_i32_1 = arith.constant 0 : i32
    return %c0_i32, %c0_i32_0 : i32, i32
  }
  func.func @transform_5(%arg0: i32) -> (i32, i32) {
    %c0_i32 = arith.constant 0 : i32
    %c0_i32_0 = arith.constant 0 : i32
    %c0_i32_1 = arith.constant 0 : i32
    return %c0_i32, %c0_i32_0 : i32, i32
  }
  func.func @transform_6(%arg0: i32) -> (i32, i32) {
    %c0_i32 = arith.constant 0 : i32
    %c0_i32_0 = arith.constant 0 : i32
    %c0_i32_1 = arith.constant 0 : i32
    return %c0_i32, %c0_i32_0 : i32, i32
  }
  func.func @transform_7(%arg0: i32) -> (i32, i32) {
    %c0_i32 = arith.constant 0 : i32
    %c0_i32_0 = arith.constant 0 : i32
    %c0_i32_1 = arith.constant 0 : i32
    return %c0_i32, %c0_i32_0 : i32, i32
  }
  func.func @transform_8(%arg0: i32) -> (i32, i32) {
    %c0_i32 = arith.constant 0 : i32
    %c0_i32_0 = arith.constant 0 : i32
    %c0_i32_1 = arith.constant 0 : i32
    return %c0_i32, %c0_i32_0 : i32, i32
  }
  func.func @transform_9(%arg0: i32) -> (i32, i32) {
    %c0_i32 = arith.constant 0 : i32
    %c0_i32_0 = arith.constant 0 : i32
    %c0_i32_1 = arith.constant 0 : i32
    return %c0_i32, %c0_i32_0 : i32, i32
  }
  func.func @transform_10(%arg0: i32) -> (i32, i32) {
    %c0_i32 = arith.constant 0 : i32
    %c0_i32_0 = arith.constant 0 : i32
    %c0_i32_1 = arith.constant 0 : i32
    return %c0_i32, %c0_i32_0 : i32, i32
  }
  func.func @transform_11(%arg0: i32) -> (i32, i32) {
    %c0_i32 = arith.constant 0 : i32
    %c0_i32_0 = arith.constant 0 : i32
    %c0_i32_1 = arith.constant 0 : i32
    return %c0_i32, %c0_i32_0 : i32, i32
  }
  func.func @transform_12(%arg0: i32) -> (i32, i32) {
    %c0_i32 = arith.constant 0 : i32
    %c0_i32_0 = arith.constant 0 : i32
    return %arg0, %c0_i32 : i32, i32
  }
}

</mosaic_0001>

<llo_original>
// kernel: forward.1
$region0: #{forward.1}
  #allocation0 [shape = 'u32[]', space=smem, size = 0x4, offset = 0x4, fixed_abs, tag = 'smem constant byte address 0x4 - core index']
  #allocation1 [shape = 'u32[72,128]{1,0:T(1,128)}', space=vmem, size = 0x9000, scoped, tag = 'internal scratch']
  %s0 = inlined_call_operand.vmem [shape: s32[8,8], index: 0, kind: input, shape index: {}]
  %s1 = inlined_call_operand.vmem [shape: s32[8,8], index: 1, kind: input, shape index: {}]
  %s2 = inlined_call_operand.hbm [shape: bf16[256,128], index: 2, kind: input, shape index: {}]
  %s3 = inlined_call_operand.vmem [shape: f32[1,128], index: 3, kind: input, shape index: {}]
  %s4 = inlined_call_operand.vmem [shape: bf16[128,128], index: 4, kind: input, shape index: {}]
  %s5 = inlined_call_operand.vmem [shape: f32[1,128], index: 5, kind: input, shape index: {}]
  %s6 = inlined_call_operand.hbm [shape: bf16[128,128], index: 6, kind: input, shape index: {}]
  %s7 = inlined_call_operand.vmem [shape: f32[1,128], index: 7, kind: input, shape index: {}]
  %s8 = inlined_call_operand.vmem [shape: bf16[128,64], index: 8, kind: input, shape index: {}]
  %s9 = inlined_call_operand.vmem [shape: f32[1,64], index: 9, kind: input, shape index: {}]
  %s10 = inlined_call_operand.vmem [shape: bf16[64,128], index: 10, kind: input, shape index: {}]
  %s11 = inlined_call_operand.vmem [shape: f32[1,128], index: 11, kind: input, shape index: {}]
  %s12 = inlined_call_operand.vmem [shape: f32[8,128], index: 12, kind: output, shape index: {}]
  %s13 = sld [smem:[#allocation0]]
  $region66: #{forward.1} parent=0
    _
  %s15 = ssub.s32 1, %s13
  %s16 = scalar_select 0, %s15, %s13
  $region1: #{forward.1} parent=0
    #allocation2 [shape = 'u8[65536]{0}', space=vmem, size = 0x10000, scoped, tag = 'input window, operand 2, single buffered']
    #allocation3 [shape = 's32[1]{0}', space=sflag, size = 0x4, scoped, tag = 'scoped memory for forward.1']
    #allocation4 [shape = 'u8[32768]{0}', space=vmem, size = 0x8000, scoped, tag = 'input window, operand 6, single buffered']
    #allocation5 [shape = 's32[1]{0}', space=sflag, size = 0x4, scoped, tag = 'scoped memory for forward.1']
    %17 = vsyncpa [#allocation3], 0
    %18 = vsyncpa [#allocation5], 0
    // Predicated region
    $region2: #{forward.1} parent=1 // pred_check
      _
    $region3: #{forward.1} parent=1 // pred_check_branch
      %20 = sbr.rel (0) target = $region5
    $region4: #{forward.1} parent=1 // pred_region
      _
    $region5: #{forward.1} parent=1 // pred_fallthru
      _
    // Predicated region
    $region6: #{forward.1} parent=1 // pred_check
      _
    $region7: #{forward.1} parent=1 // pred_check_branch
      %22 = sbr.rel (0) target = $region9
    $region8: #{forward.1} parent=1 // pred_region
      _
    $region9: #{forward.1} parent=1 // pred_fallthru
      _
    // Predicated region
    $region10: #{forward.1} parent=1 // pred_check
      _
    $region11: #{forward.1} parent=1 // pred_check_branch
      %24 = sbr.rel (0) target = $region13
    $region12: #{forward.1} parent=1 // pred_region
      %26 = vsyncadd [#allocation3], 0
      %s27 = sshll.u32 %s2, 4
      %s28 = int_to_ptr.hbm [resolvable:$true] %s27
      %s29 = sshll.u32 [#allocation2], 4
      %s30 = int_to_ptr.vmem [resolvable:$true] %s29
      %35 = dma.hbm_to_vmem [thread:$0]  %s28, 2048, %s30, [#allocation3], 64, 64, 4
    $region13: #{forward.1} parent=1 // pred_fallthru
      _
    // Predicated region
    $region14: #{forward.1} parent=1 // pred_check
      _
    $region15: #{forward.1} parent=1 // pred_check_branch
      %37 = sbr.rel (0) target = $region17
    $region16: #{forward.1} parent=1 // pred_region
      _
    $region17: #{forward.1} parent=1 // pred_fallthru
      _
    // Predicated region
    $region18: #{forward.1} parent=1 // pred_check
      _
    $region19: #{forward.1} parent=1 // pred_check_branch
      %39 = sbr.rel (0) target = $region21
    $region20: #{forward.1} parent=1 // pred_region
      _
    $region21: #{forward.1} parent=1 // pred_fallthru
      _
    // Predicated region
    $region22: #{forward.1} parent=1 // pred_check
      _
    $region23: #{forward.1} parent=1 // pred_check_branch
      %41 = sbr.rel (0) target = $region25
    $region24: #{forward.1} parent=1 // pred_region
      _
    $region25: #{forward.1} parent=1 // pred_fallthru
      _
    // Predicated region
    $region26: #{forward.1} parent=1 // pred_check
      _
    $region27: #{forward.1} parent=1 // pred_check_branch
      %43 = sbr.rel (0) target = $region29
    $region28: #{forward.1} parent=1 // pred_region
      %45 = vsyncadd [#allocation5], 0
      %s46 = sshll.u32 %s6, 4
      %s47 = int_to_ptr.hbm [resolvable:$true] %s46
      %s48 = sshll.u32 [#allocation4], 4
      %s49 = int_to_ptr.vmem [resolvable:$true] %s48
      %54 = dma.hbm_to_vmem [thread:$0]  %s47, 1024, %s49, [#allocation5], 64, 64, 4
    $region29: #{forward.1} parent=1 // pred_fallthru
      _
    // Predicated region
    $region30: #{forward.1} parent=1 // pred_check
      _
    $region31: #{forward.1} parent=1 // pred_check_branch
      %56 = sbr.rel (0) target = $region33
    $region32: #{forward.1} parent=1 // pred_region
      _
    $region33: #{forward.1} parent=1 // pred_fallthru
      _
    // Predicated region
    $region34: #{forward.1} parent=1 // pred_check
      _
    $region35: #{forward.1} parent=1 // pred_check_branch
      %58 = sbr.rel (0) target = $region37
    $region36: #{forward.1} parent=1 // pred_region
      _
    $region37: #{forward.1} parent=1 // pred_fallthru
      _
    // Predicated region
    $region38: #{forward.1} parent=1 // pred_check
      _
    $region39: #{forward.1} parent=1 // pred_check_branch
      %60 = sbr.rel (0) target = $region41
    $region40: #{forward.1} parent=1 // pred_region
      _
    $region41: #{forward.1} parent=1 // pred_fallthru
      _
    // Predicated region
    $region42: #{forward.1} parent=1 // pred_check
      _
    $region43: #{forward.1} parent=1 // pred_check_branch
      %62 = sbr.rel (0) target = $region45
    $region44: #{forward.1} parent=1 // pred_region
      _
    $region45: #{forward.1} parent=1 // pred_fallthru
      _
    // Predicated region
    $region46: #{forward.1} parent=1 // pred_check
      _
    $region47: #{forward.1} parent=1 // pred_check_branch
      %64 = sbr.rel (0) target = $region49
    $region48: #{forward.1} parent=1 // pred_region
      _
    $region49: #{forward.1} parent=1 // pred_fallthru
      _
    // Predicated region
    $region50: #{forward.1} parent=1 // pred_check
      _
    $region51: #{forward.1} parent=1 // pred_check_branch
      %66 = sbr.rel (0) target = $region53
    $region52: #{forward.1} parent=1 // pred_region
      %68 = dma.done [#allocation3], 2048
    $region53: #{forward.1} parent=1 // pred_fallthru
      _
    // Predicated region
    $region54: #{forward.1} parent=1 // pred_check
      _
    $region55: #{forward.1} parent=1 // pred_check_branch
      %70 = sbr.rel (0) target = $region57
    $region56: #{forward.1} parent=1 // pred_region
      %72 = dma.done [#allocation5], 1024
    $region57: #{forward.1} parent=1 // pred_fallthru
      _
    %v74 = vlaneseq
    %v75 = vand.u32 %v74, 127
    %v76 = vld [vmem:[%s0] sm:$0xff]
    %77 = vset.pattern.permute.xlu0 0
    %78 = vperm.xlu0 %77, %v76
    %v79 = vpop.permute.xlu0 %78
    %vm80 = vcmp.eq.s32.totalorder %v79, %v75
    %v81 = vsel %vm80, 1, 0
    %v82 = vcvt.s32.f32 %v81
    %v83 = vadd.f32 %v82, 0.0
    %84 = vset.pattern.permute.xlu0 1
    %85 = vperm.xlu0 %84, %v76
    %v86 = vpop.permute.xlu0 %85
    %vm87 = vcmp.eq.s32.totalorder %v86, %v75
    %v88 = vsel %vm87, 1, 0
    %v89 = vcvt.s32.f32 %v88
    %v90 = vadd.f32 %v83, %v89
    %91 = vset.pattern.permute.xlu0 2
    %92 = vperm.xlu0 %91, %v76
    %v93 = vpop.permute.xlu0 %92
    %vm94 = vcmp.eq.s32.totalorder %v93, %v75
    %v95 = vsel %vm94, 1, 0
    %v96 = vcvt.s32.f32 %v95
    %v97 = vadd.f32 %v90, %v96
    %98 = vset.pattern.permute.xlu0 3
    %99 = vperm.xlu0 %98, %v76
    %v100 = vpop.permute.xlu0 %99
    %vm101 = vcmp.eq.s32.totalorder %v100, %v75
    %v102 = vsel %vm101, 1, 0
    %v103 = vcvt.s32.f32 %v102
    %v104 = vadd.f32 %v97, %v103
    %105 = vset.pattern.permute.xlu0 4
    %106 = vperm.xlu0 %105, %v76
    %v107 = vpop.permute.xlu0 %106
    %vm108 = vcmp.eq.s32.totalorder %v107, %v75
    %v109 = vsel %vm108, 1, 0
    %v110 = vcvt.s32.f32 %v109
    %v111 = vadd.f32 %v104, %v110
    %112 = vset.pattern.permute.xlu0 5
    %113 = vperm.xlu0 %112, %v76
    %v114 = vpop.permute.xlu0 %113
    %vm115 = vcmp.eq.s32.totalorder %v114, %v75
    %v116 = vsel %vm115, 1, 0
    %v117 = vcvt.s32.f32 %v116
    %v118 = vadd.f32 %v111, %v117
    %119 = vset.pattern.permute.xlu0 6
    %120 = vperm.xlu0 %119, %v76
    %v121 = vpop.permute.xlu0 %120
    %vm122 = vcmp.eq.s32.totalorder %v121, %v75
    %v123 = vsel %vm122, 1, 0
    %v124 = vcvt.s32.f32 %v123
    %v125 = vadd.f32 %v118, %v124
    %126 = vset.pattern.permute.xlu0 7
    %127 = vperm.xlu0 %126, %v76
    %v128 = vpop.permute.xlu0 %127
    %vm129 = vcmp.eq.s32.totalorder %v128, %v75
    %v130 = vsel %vm129, 1, 0
    %v131 = vcvt.s32.f32 %v130
    %v132 = vadd.f32 %v125, %v131
    %v133 = vld [vmem:[%s1] sm:$0xff]
    %134 = vset.pattern.permute.xlu0 0
    %135 = vperm.xlu0 %134, %v133
    %v136 = vpop.permute.xlu0 %135
    %vm137 = vcmp.eq.s32.totalorder %v136, %v75
    %v138 = vsel %vm137, 1, 0
    %v139 = vcvt.s32.f32 %v138
    %v140 = vadd.f32 %v139, 0.0
    %141 = vset.pattern.permute.xlu0 1
    %142 = vperm.xlu0 %141, %v133
    %v143 = vpop.permute.xlu0 %142
    %vm144 = vcmp.eq.s32.totalorder %v143, %v75
    %v145 = vsel %vm144, 1, 0
    %v146 = vcvt.s32.f32 %v145
    %v147 = vadd.f32 %v140, %v146
    %148 = vset.pattern.permute.xlu0 2
    %149 = vperm.xlu0 %148, %v133
    %v150 = vpop.permute.xlu0 %149
    %vm151 = vcmp.eq.s32.totalorder %v150, %v75
    %v152 = vsel %vm151, 1, 0
    %v153 = vcvt.s32.f32 %v152
    %v154 = vadd.f32 %v147, %v153
    %155 = vset.pattern.permute.xlu0 3
    %156 = vperm.xlu0 %155, %v133
    %v157 = vpop.permute.xlu0 %156
    %vm158 = vcmp.eq.s32.totalorder %v157, %v75
    %v159 = vsel %vm158, 1, 0
    %v160 = vcvt.s32.f32 %v159
    %v161 = vadd.f32 %v154, %v160
    %162 = vset.pattern.permute.xlu0 4
    %163 = vperm.xlu0 %162, %v133
    %v164 = vpop.permute.xlu0 %163
    %vm165 = vcmp.eq.s32.totalorder %v164, %v75
    %v166 = vsel %vm165, 1, 0
    %v167 = vcvt.s32.f32 %v166
    %v168 = vadd.f32 %v161, %v167
    %169 = vset.pattern.permute.xlu0 5
    %170 = vperm.xlu0 %169, %v133
    %v171 = vpop.permute.xlu0 %170
    %vm172 = vcmp.eq.s32.totalorder %v171, %v75
    %v173 = vsel %vm172, 1, 0
    %v174 = vcvt.s32.f32 %v173
    %v175 = vadd.f32 %v168, %v174
    %176 = vset.pattern.permute.xlu0 6
    %177 = vperm.xlu0 %176, %v133
    %v178 = vpop.permute.xlu0 %177
    %vm179 = vcmp.eq.s32.totalorder %v178, %v75
    %v180 = vsel %vm179, 1, 0
    %v181 = vcvt.s32.f32 %v180
    %v182 = vadd.f32 %v175, %v181
    %183 = vset.pattern.permute.xlu0 7
    %184 = vperm.xlu0 %183, %v133
    %v185 = vpop.permute.xlu0 %184
    %vm186 = vcmp.eq.s32.totalorder %v185, %v75
    %v187 = vsel %vm186, 1, 0
    %v188 = vcvt.s32.f32 %v187
    %v189 = vadd.f32 %v182, %v188
    %v190 = vpack.c.bf16 %v132, %v132
    %v191 = vpack.c.bf16 %v189, %v189
    %v192 = vld [vmem:[#allocation2] sm:$0xf]
    %v193 = vld [vmem:[#allocation2 + $0x4] sm:$0xf]
    %v194 = vld [vmem:[#allocation2 + $0x8] sm:$0xf]
    %v195 = vld [vmem:[#allocation2 + $0xc] sm:$0xf]
    %v196 = vld [vmem:[#allocation2 + $0x10] sm:$0xf]
    %v197 = vld [vmem:[#allocation2 + $0x14] sm:$0xf]
    %v198 = vld [vmem:[#allocation2 + $0x18] sm:$0xf]
    %v199 = vld [vmem:[#allocation2 + $0x1c] sm:$0xf]
    %v200 = vld [vmem:[#allocation2 + $0x20] sm:$0xf]
    %v201 = vld [vmem:[#allocation2 + $0x24] sm:$0xf]
    %v202 = vld [vmem:[#allocation2 + $0x28] sm:$0xf]
    %v203 = vld [vmem:[#allocation2 + $0x2c] sm:$0xf]
    %v204 = vld [vmem:[#allocation2 + $0x30] sm:$0xf]
    %v205 = vld [vmem:[#allocation2 + $0x34] sm:$0xf]
    %v206 = vld [vmem:[#allocation2 + $0x38] sm:$0xf]
    %v207 = vld [vmem:[#allocation2 + $0x3c] sm:$0xf]
    %v208 = vld [vmem:[#allocation2 + $0x40] sm:$0xf]
    %v209 = vld [vmem:[#allocation2 + $0x44] sm:$0xf]
    %v210 = vld [vmem:[#allocation2 + $0x48] sm:$0xf]
    %v211 = vld [vmem:[#allocation2 + $0x4c] sm:$0xf]
    %v212 = vld [vmem:[#allocation2 + $0x50] sm:$0xf]
    %v213 = vld [vmem:[#allocation2 + $0x54] sm:$0xf]
    %v214 = vld [vmem:[#allocation2 + $0x58] sm:$0xf]
    %v215 = vld [vmem:[#allocation2 + $0x5c] sm:$0xf]
    %v216 = vld [vmem:[#allocation2 + $0x60] sm:$0xf]
    %v217 = vld [vmem:[#allocation2 + $0x64] sm:$0xf]
    %v218 = vld [vmem:[#allocation2 + $0x68] sm:$0xf]
    %v219 = vld [vmem:[#allocation2 + $0x6c] sm:$0xf]
    %v220 = vld [vmem:[#allocation2 + $0x70] sm:$0xf]
    %v221 = vld [vmem:[#allocation2 + $0x74] sm:$0xf]
    %v222 = vld [vmem:[#allocation2 + $0x78] sm:$0xf]
    %v223 = vld [vmem:[#allocation2 + $0x7c] sm:$0xf]
    %v224 = vld [vmem:[%s3] sm:$0x1]
    %v226 = vperm.slane %v224, 0
    %v260 = vunpack.c.l.b16 %v192
    %v261 = vunpack.c.l.b16 %v193
    %v262 = vunpack.c.l.b16 %v194
    %v263 = vunpack.c.l.b16 %v195
    %v264 = vunpack.c.l.b16 %v196
    %v265 = vunpack.c.l.b16 %v197
    %v266 = vunpack.c.l.b16 %v198
    %v267 = vunpack.c.l.b16 %v199
    %v268 = vunpack.c.l.b16 %v200
    %v269 = vunpack.c.l.b16 %v201
    %v270 = vunpack.c.l.b16 %v202
    %v271 = vunpack.c.l.b16 %v203
    %v272 = vunpack.c.l.b16 %v204
    %v273 = vunpack.c.l.b16 %v205
    %v274 = vunpack.c.l.b16 %v206
    %v275 = vunpack.c.l.b16 %v207
    %v276 = vunpack.c.l.b16 %v208
    %v277 = vunpack.c.l.b16 %v209
    %v278 = vunpack.c.l.b16 %v210
    %v279 = vunpack.c.l.b16 %v211
    %v280 = vunpack.c.l.b16 %v212
    %v281 = vunpack.c.l.b16 %v213
    %v282 = vunpack.c.l.b16 %v214
    %v283 = vunpack.c.l.b16 %v215
    %v284 = vunpack.c.l.b16 %v216
    %v285 = vunpack.c.l.b16 %v217
    %v286 = vunpack.c.l.b16 %v218
    %v287 = vunpack.c.l.b16 %v219
    %v288 = vunpack.c.l.b16 %v220
    %v289 = vunpack.c.l.b16 %v221
    %v290 = vunpack.c.l.b16 %v222
    %v291 = vunpack.c.l.b16 %v223
    %v292 = vpack.c.b16 %v261, %v260
    %v293 = vpack.c.b16 %v263, %v262
    %v294 = vpack.c.b16 %v265, %v264
    %v295 = vpack.c.b16 %v267, %v266
    %v296 = vpack.c.b16 %v269, %v268
    %v297 = vpack.c.b16 %v271, %v270
    %v298 = vpack.c.b16 %v273, %v272
    %v299 = vpack.c.b16 %v275, %v274
    %v300 = vpack.c.b16 %v277, %v276
    %v301 = vpack.c.b16 %v279, %v278
    %v302 = vpack.c.b16 %v281, %v280
    %v303 = vpack.c.b16 %v283, %v282
    %v304 = vpack.c.b16 %v285, %v284
    %v305 = vpack.c.b16 %v287, %v286
    %v306 = vpack.c.b16 %v289, %v288
    %v307 = vpack.c.b16 %v291, %v290
    %324 = vmatpush.bf16.msra.mxu0 %v299
    %325 = vmatpush.bf16.msra.mxu0 %v298
    %326 = vmatpush.bf16.msra.mxu0 %v297
    %327 = vmatpush.bf16.msra.mxu0 %v296
    %328 = vmatpush.bf16.msra.mxu0 %v295
    %329 = vmatpush.bf16.msra.mxu0 %v294
    %330 = vmatpush.bf16.msra.mxu0 %v293
    %331 = vmatpush.bf16.msra.mxu0 %v292
    %332 = vmatmul.bf16.gmra.mxu0 %v190
    %v333 = vpop.f32.mrf.mxu0
    %v334 = vadd.f32 %v226, %v333
    %v335 = vpop.f32.mrf.mxu0
    %336 = vdwg.mxu0
    %337 = vmatpush.bf16.msra.mxu0 %v307
    %338 = vmatpush.bf16.msra.mxu0 %v306
    %339 = vmatpush.bf16.msra.mxu0 %v305
    %340 = vmatpush.bf16.msra.mxu0 %v304
    %341 = vmatpush.bf16.msra.mxu0 %v303
    %342 = vmatpush.bf16.msra.mxu0 %v302
    %343 = vmatpush.bf16.msra.mxu0 %v301
    %344 = vmatpush.bf16.msra.mxu0 %v300
    %345 = vmatmul.bf16.gmra.mxu0 %v191
    %v346 = vpop.f32.mrf.mxu0
    %v347 = vadd.f32 %v334, %v346
    %v348 = vpop.f32.mrf.mxu0
    %349 = vdwg.mxu0
    %v350 = vmax.f32 %v347, 0.0
    %v351 = vpack.c.bf16 %v350, %v350
    %v352 = vld [vmem:[%s4] sm:$0xf]
    %v353 = vld [vmem:[%s4 + $0x4] sm:$0xf]
    %v354 = vld [vmem:[%s4 + $0x8] sm:$0xf]
    %v355 = vld [vmem:[%s4 + $0xc] sm:$0xf]
    %v356 = vld [vmem:[%s4 + $0x10] sm:$0xf]
    %v357 = vld [vmem:[%s4 + $0x14] sm:$0xf]
    %v358 = vld [vmem:[%s4 + $0x18] sm:$0xf]
    %v359 = vld [vmem:[%s4 + $0x1c] sm:$0xf]
    %v360 = vld [vmem:[%s4 + $0x20] sm:$0xf]
    %v361 = vld [vmem:[%s4 + $0x24] sm:$0xf]
    %v362 = vld [vmem:[%s4 + $0x28] sm:$0xf]
    %v363 = vld [vmem:[%s4 + $0x2c] sm:$0xf]
    %v364 = vld [vmem:[%s4 + $0x30] sm:$0xf]
    %v365 = vld [vmem:[%s4 + $0x34] sm:$0xf]
    %v366 = vld [vmem:[%s4 + $0x38] sm:$0xf]
    %v367 = vld [vmem:[%s4 + $0x3c] sm:$0xf]
    %v368 = vld [vmem:[%s5] sm:$0x1]
    %v370 = vperm.slane %v368, 0
    %v388 = vunpack.c.l.b16 %v352
    %v389 = vunpack.c.l.b16 %v353
    %v390 = vunpack.c.l.b16 %v354
    %v391 = vunpack.c.l.b16 %v355
    %v392 = vunpack.c.l.b16 %v356
    %v393 = vunpack.c.l.b16 %v357
    %v394 = vunpack.c.l.b16 %v358
    %v395 = vunpack.c.l.b16 %v359
    %v396 = vunpack.c.l.b16 %v360
    %v397 = vunpack.c.l.b16 %v361
    %v398 = vunpack.c.l.b16 %v362
    %v399 = vunpack.c.l.b16 %v363
    %v400 = vunpack.c.l.b16 %v364
    %v401 = vunpack.c.l.b16 %v365
    %v402 = vunpack.c.l.b16 %v366
    %v403 = vunpack.c.l.b16 %v367
    %v404 = vpack.c.b16 %v389, %v388
    %v405 = vpack.c.b16 %v391, %v390
    %v406 = vpack.c.b16 %v393, %v392
    %v407 = vpack.c.b16 %v395, %v394
    %v408 = vpack.c.b16 %v397, %v396
    %v409 = vpack.c.b16 %v399, %v398
    %v410 = vpack.c.b16 %v401, %v400
    %v411 = vpack.c.b16 %v403, %v402
    %420 = vmatpush.bf16.msra.mxu0 %v411
    %421 = vmatpush.bf16.msra.mxu0 %v410
    %422 = vmatpush.bf16.msra.mxu0 %v409
    %423 = vmatpush.bf16.msra.mxu0 %v408
    %424 = vmatpush.bf16.msra.mxu0 %v407
    %425 = vmatpush.bf16.msra.mxu0 %v406
    %426 = vmatpush.bf16.msra.mxu0 %v405
    %427 = vmatpush.bf16.msra.mxu0 %v404
    %428 = vmatmul.bf16.gmra.mxu0 %v351
    %v429 = vpop.f32.mrf.mxu0
    %v430 = vadd.f32 %v370, %v429
    %v431 = vpop.f32.mrf.mxu0
    %432 = vdwg.mxu0
    %v433 = vmax.f32 %v430, 0.0
    %v434 = vpack.c.bf16 %v433, %v433
    %v435 = vld [vmem:[#allocation4] sm:$0xf]
    %v436 = vld [vmem:[#allocation4 + $0x4] sm:$0xf]
    %v437 = vld [vmem:[#allocation4 + $0x8] sm:$0xf]
    %v438 = vld [vmem:[#allocation4 + $0xc] sm:$0xf]
    %v439 = vld [vmem:[#allocation4 + $0x10] sm:$0xf]
    %v440 = vld [vmem:[#allocation4 + $0x14] sm:$0xf]
    %v441 = vld [vmem:[#allocation4 + $0x18] sm:$0xf]
    %v442 = vld [vmem:[#allocation4 + $0x1c] sm:$0xf]
    %v443 = vld [vmem:[#allocation4 + $0x20] sm:$0xf]
    %v444 = vld [vmem:[#allocation4 + $0x24] sm:$0xf]
    %v445 = vld [vmem:[#allocation4 + $0x28] sm:$0xf]
    %v446 = vld [vmem:[#allocation4 + $0x2c] sm:$0xf]
    %v447 = vld [vmem:[#allocation4 + $0x30] sm:$0xf]
    %v448 = vld [vmem:[#allocation4 + $0x34] sm:$0xf]
    %v449 = vld [vmem:[#allocation4 + $0x38] sm:$0xf]
    %v450 = vld [vmem:[#allocation4 + $0x3c] sm:$0xf]
    %v451 = vld [vmem:[%s7] sm:$0x1]
    %v453 = vperm.slane %v451, 0
    %v471 = vunpack.c.l.b16 %v435
    %v472 = vunpack.c.l.b16 %v436
    %v473 = vunpack.c.l.b16 %v437
    %v474 = vunpack.c.l.b16 %v438
    %v475 = vunpack.c.l.b16 %v439
    %v476 = vunpack.c.l.b16 %v440
    %v477 = vunpack.c.l.b16 %v441
    %v478 = vunpack.c.l.b16 %v442
    %v479 = vunpack.c.l.b16 %v443
    %v480 = vunpack.c.l.b16 %v444
    %v481 = vunpack.c.l.b16 %v445
    %v482 = vunpack.c.l.b16 %v446
    %v483 = vunpack.c.l.b16 %v447
    %v484 = vunpack.c.l.b16 %v448
    %v485 = vunpack.c.l.b16 %v449
    %v486 = vunpack.c.l.b16 %v450
    %v487 = vpack.c.b16 %v472, %v471
    %v488 = vpack.c.b16 %v474, %v473
    %v489 = vpack.c.b16 %v476, %v475
    %v490 = vpack.c.b16 %v478, %v477
    %v491 = vpack.c.b16 %v480, %v479
    %v492 = vpack.c.b16 %v482, %v481
    %v493 = vpack.c.b16 %v484, %v483
    %v494 = vpack.c.b16 %v486, %v485
    %503 = vmatpush.bf16.msra.mxu0 %v494
    %504 = vmatpush.bf16.msra.mxu0 %v493
    %505 = vmatpush.bf16.msra.mxu0 %v492
    %506 = vmatpush.bf16.msra.mxu0 %v491
    %507 = vmatpush.bf16.msra.mxu0 %v490
    %508 = vmatpush.bf16.msra.mxu0 %v489
    %509 = vmatpush.bf16.msra.mxu0 %v488
    %510 = vmatpush.bf16.msra.mxu0 %v487
    %511 = vmatmul.bf16.gmra.mxu0 %v434
    %v512 = vpop.f32.mrf.mxu0
    %v513 = vadd.f32 %v453, %v512
    %v514 = vpop.f32.mrf.mxu0
    %515 = vdwg.mxu0
    %v516 = vmax.f32 %v513, 0.0
    %v517 = vpack.c.bf16 %v516, %v516
    %v518 = vld [vmem:[%s8] sm:$0xf]
    %v519 = vld [vmem:[%s8 + $0x4] sm:$0xf]
    %v520 = vld [vmem:[%s8 + $0x8] sm:$0xf]
    %v521 = vld [vmem:[%s8 + $0xc] sm:$0xf]
    %v522 = vld [vmem:[%s8 + $0x10] sm:$0xf]
    %v523 = vld [vmem:[%s8 + $0x14] sm:$0xf]
    %v524 = vld [vmem:[%s8 + $0x18] sm:$0xf]
    %v525 = vld [vmem:[%s8 + $0x1c] sm:$0xf]
    %v526 = vld [vmem:[%s8 + $0x20] sm:$0xf]
    %v527 = vld [vmem:[%s8 + $0x24] sm:$0xf]
    %v528 = vld [vmem:[%s8 + $0x28] sm:$0xf]
    %v529 = vld [vmem:[%s8 + $0x2c] sm:$0xf]
    %v530 = vld [vmem:[%s8 + $0x30] sm:$0xf]
    %v531 = vld [vmem:[%s8 + $0x34] sm:$0xf]
    %v532 = vld [vmem:[%s8 + $0x38] sm:$0xf]
    %v533 = vld [vmem:[%s8 + $0x3c] sm:$0xf]
    %v534 = vld [vmem:[%s9] sm:$0x1]
    %v536 = vperm.slane %v534, 0
    %v554 = vunpack.c.l.b16 %v518
    %v555 = vunpack.c.l.b16 %v519
    %v556 = vunpack.c.l.b16 %v520
    %v557 = vunpack.c.l.b16 %v521
    %v558 = vunpack.c.l.b16 %v522
    %v559 = vunpack.c.l.b16 %v523
    %v560 = vunpack.c.l.b16 %v524
    %v561 = vunpack.c.l.b16 %v525
    %v562 = vunpack.c.l.b16 %v526
    %v563 = vunpack.c.l.b16 %v527
    %v564 = vunpack.c.l.b16 %v528
    %v565 = vunpack.c.l.b16 %v529
    %v566 = vunpack.c.l.b16 %v530
    %v567 = vunpack.c.l.b16 %v531
    %v568 = vunpack.c.l.b16 %v532
    %v569 = vunpack.c.l.b16 %v533
    %v570 = vpack.c.b16 %v555, %v554
    %v571 = vpack.c.b16 %v557, %v556
    %v572 = vpack.c.b16 %v559, %v558
    %v573 = vpack.c.b16 %v561, %v560
    %v574 = vpack.c.b16 %v563, %v562
    %v575 = vpack.c.b16 %v565, %v564
    %v576 = vpack.c.b16 %v567, %v566
    %v577 = vpack.c.b16 %v569, %v568
    %586 = vmatpush.bf16.msra.mxu0 %v577
    %587 = vmatpush.bf16.msra.mxu0 %v576
    %588 = vmatpush.bf16.msra.mxu0 %v575
    %589 = vmatpush.bf16.msra.mxu0 %v574
    %590 = vmatpush.bf16.msra.mxu0 %v573
    %591 = vmatpush.bf16.msra.mxu0 %v572
    %592 = vmatpush.bf16.msra.mxu0 %v571
    %593 = vmatpush.bf16.msra.mxu0 %v570
    %594 = vmatmul.bf16.gmra.mxu0 %v517
    %v595 = vpop.f32.mrf.mxu0
    %v596 = vadd.f32 %v536, %v595
    %v597 = vpop.f32.mrf.mxu0
    %598 = vdwg.mxu0
    %v599 = vmax.f32 %v596, 0.0
    %v600 = vpack.c.bf16 %v599, %v599
    %v601 = vld [vmem:[%s10] sm:$0xf]
    %v602 = vld [vmem:[%s10 + $0x4] sm:$0xf]
    %v603 = vld [vmem:[%s10 + $0x8] sm:$0xf]
    %v604 = vld [vmem:[%s10 + $0xc] sm:$0xf]
    %v605 = vld [vmem:[%s10 + $0x10] sm:$0xf]
    %v606 = vld [vmem:[%s10 + $0x14] sm:$0xf]
    %v607 = vld [vmem:[%s10 + $0x18] sm:$0xf]
    %v608 = vld [vmem:[%s10 + $0x1c] sm:$0xf]
    %v609 = vld [vmem:[%s11] sm:$0x1]
    %v611 = vperm.slane %v609, 0
    %v621 = vunpack.c.l.b16 %v601
    %v622 = vunpack.c.l.b16 %v602
    %v623 = vunpack.c.l.b16 %v603
    %v624 = vunpack.c.l.b16 %v604
    %v625 = vunpack.c.l.b16 %v605
    %v626 = vunpack.c.l.b16 %v606
    %v627 = vunpack.c.l.b16 %v607
    %v628 = vunpack.c.l.b16 %v608
    %v629 = vpack.c.b16 %v622, %v621
    %v630 = vpack.c.b16 %v624, %v623
    %v631 = vpack.c.b16 %v626, %v625
    %v632 = vpack.c.b16 %v628, %v627
    %vm637 = vcmask 523264
    %v639 = vsel %vm637, %v600, 0
    %641 = vmatpush.bf16.msra.mxu0 0
    %642 = vmatpush.bf16.msra.mxu0 0
    %643 = vmatpush.bf16.msra.mxu0 0
    %644 = vmatpush.bf16.msra.mxu0 0
    %645 = vmatpush.bf16.msra.mxu0 %v632
    %646 = vmatpush.bf16.msra.mxu0 %v631
    %647 = vmatpush.bf16.msra.mxu0 %v630
    %648 = vmatpush.bf16.msra.mxu0 %v629
    %649 = vmatmul.bf16.gmra.mxu0 %v639
    %v650 = vpop.f32.mrf.mxu0
    %v651 = vadd.f32 %v611, %v650
    %v652 = vpop.f32.mrf.mxu0
    %653 = vdwg.mxu0
    %654 = vst [vmem:[%s12] sm:$0xff] %v651
    // Predicated region
    $region58: #{forward.1} parent=1 // pred_check
      _
    $region59: #{forward.1} parent=1 // pred_check_branch
      %656 = sbr.rel (0) target = $region61
    $region60: #{forward.1} parent=1 // pred_region
      _
    $region61: #{forward.1} parent=1 // pred_fallthru
      _
    // Predicated region
    $region62: #{forward.1} parent=1 // pred_check
      _
    $region63: #{forward.1} parent=1 // pred_check_branch
      %658 = sbr.rel (0) target = $region65
    $region64: #{forward.1} parent=1 // pred_region
      _
    $region65: #{forward.1} parent=1 // pred_fallthru
      _
    %659 = vsyncpa [#allocation3], 1
    %660 = vsyncpa [#allocation5], 1

</llo_original>
